<compile_context>
chip_gen: v7x
topology: tpu7x:2x2x1
jax: 0.10.0
libtpu: 0.0.40
codegen_flags: <defaults>
</compile_context>

<pallas_src>
import jax
import jax.numpy as jnp
from jax.experimental import pallas as pl
from jax.experimental.pallas import tpu as pltpu

MAX_STD = 2.0  # stand-in for cfg.max_std (deterministic, in-script)

_VMEM_LIMIT_BYTES = 32 << 20  # safe on v5e/v6e (128 MiB phys) and v7x (64 MiB phys)


def _scaled_sigmoid_kernel(x_ref, o_ref):
    # Upcast once: keeps EUP exp on the fast f32 path (v5e has no bf16 EUP),
    # and the extra casts are free filler under the DMA-bound roofline.
    x = x_ref[...].astype(jnp.float32)
    o_ref[...] = (jax.nn.sigmoid(x) * MAX_STD).astype(o_ref.dtype)


def _tile_bytes_target():
    # Per-generation tile cap: v7x has only 64 MiB physical VMEM -> keep the
    # double-buffered footprint (4 x tile) small; v5e/v6e can take 6 MiB tiles
    # under the raised 32 MiB scoped limit.
    try:
        kind = jax.devices()[0].device_kind.lower()
    except Exception:  # pragma: no cover - defensive
        kind = ""
    if "v7" in kind:
        return 4 << 20
    return 6 << 20


def scaled_sigmoid(x):
    """Elementwise sigmoid(x) * MAX_STD via a tiled Pallas TPU kernel.

    Accepts any shape / float dtype; returns the same shape and dtype.
    """
    orig_shape = x.shape
    orig_dtype = x.dtype
    total = int(x.size)

    if total == 0:
        return x  # empty-input guard: nothing to do

    itemsize = jnp.dtype(orig_dtype).itemsize
    pack = max(1, 4 // itemsize)      # rows packed per sublane (1/2/4)
    sublane = 8 * pack                # dtype-aware sublane multiple

    # Pick a lane width that divides the element count exactly (no pad pass).
    W = None
    for cand in (2048, 1024, 512, 256, 128):
        if total % cand == 0:
            W = cand
            break

    pad = 0
    if W is None:
        # Fallback: pad up to a multiple of 128 lanes (one extra pass, rare).
        W = 128
        rows = -(-total // W)
        pad = rows * W - total
    else:
        rows = total // W

    flat = x.reshape(-1)
    if pad:
        flat = jnp.pad(flat, (0, pad))
    x2 = flat.reshape(rows, W)

    # --- tile rows --------------------------------------------------------
    tile_bytes = _tile_bytes_target()
    if rows <= sublane:
        tr = rows  # full-extent block is legal even when < 8 sublanes
    else:
        target_rows = max(sublane, tile_bytes // (W * itemsize))
        tr = max(sublane, (target_rows // sublane) * sublane)
        tr = min(tr, (rows // sublane) * sublane)
        # Guarantee >=2 (ideally >=4) tiles so v7x's two TensorCores both
        # get work on small/medium inputs.
        max_aligned_tiles = rows // sublane
        desired = min(4, max_aligned_tiles)
        if desired > 1:
            cap = -(-rows // desired)
            cap = max(sublane, -(-cap // sublane) * sublane)
            tr = min(tr, cap)

    grid = (pl.cdiv(rows, tr),)  # ragged last block is fine for elementwise

    out2 = pl.pallas_call(
        _scaled_sigmoid_kernel,
        out_shape=jax.ShapeDtypeStruct((rows, W), orig_dtype),
        grid=grid,
        in_specs=[pl.BlockSpec((tr, W), lambda i: (i, 0))],
        out_specs=pl.BlockSpec((tr, W), lambda i: (i, 0)),
        compiler_params=pltpu.CompilerParams(
            dimension_semantics=("parallel",),
            vmem_limit_bytes=_VMEM_LIMIT_BYTES,
        ),
    )(x2)

    flat_out = out2.reshape(-1)
    if pad:
        flat_out = flat_out[:total]
    return flat_out.reshape(orig_shape)


if __name__ == "__main__":
    key = jax.random.PRNGKey(0)

    # Primary check: small NCHW-shaped input consistent with a conv pipeline.
    x = jax.random.normal(key, (2, 4, 16, 16), dtype=jnp.float32)
    y = jax.block_until_ready(scaled_sigmoid(x))
    ref = jax.nn.sigmoid(x) * MAX_STD
    assert y.shape == x.shape and y.dtype == x.dtype
    assert jnp.allclose(y, ref, atol=1e-5, rtol=1e-5)

    # Secondary check: odd size exercising the pad-fallback path.
    x2 = jax.random.normal(jax.random.PRNGKey(1), (3, 5, 7), dtype=jnp.float32)
    y2 = jax.block_until_ready(scaled_sigmoid(x2))
    ref2 = jax.nn.sigmoid(x2) * MAX_STD
    assert y2.shape == x2.shape and jnp.allclose(y2, ref2, atol=1e-5, rtol=1e-5)

    print("KERNEL_OK")
</pallas_src>

<mosaic_0001>
module attributes {stable_mosaic.version = 11 : i64} {
  func.func @_scaled_sigmoid_kernel(%arg0: i32, %arg1: memref<1x2048xf32, #tpu.memory_space<vmem>>, %arg2: memref<1x2048xf32, #tpu.memory_space<vmem>>) attributes {dimension_semantics = [#tpu.dimension_semantics<parallel>], iteration_bounds = array<i64: 1>, scalar_prefetch = 0 : i64, scratch_operands = 0 : i64, tpu.core_type = #tpu.core_type<tc>, window_params = [{transform_indices = @transform_0, window_bounds = array<i64: 1, 2048>}, {transform_indices = @transform_1, window_bounds = array<i64: 1, 2048>}]} {
    %c0 = arith.constant 0 : index
    %c0_0 = arith.constant 0 : index
    %0 = vector.load %arg1[%c0, %c0_0] : memref<1x2048xf32, #tpu.memory_space<vmem>>, vector<1x2048xf32>
    %1 = arith.negf %0 : vector<1x2048xf32>
    %2 = math.exp %1 : vector<1x2048xf32>
    %cst = arith.constant 1.000000e+00 : f32
    %3 = vector.broadcast %cst : f32 to vector<1x2048xf32>
    %4 = arith.addf %3, %2 : vector<1x2048xf32>
    %5 = arith.divf %3, %4 : vector<1x2048xf32>
    %cst_1 = arith.constant 2.000000e+00 : f32
    %6 = vector.broadcast %cst_1 : f32 to vector<1x2048xf32>
    %7 = arith.mulf %5, %6 : vector<1x2048xf32>
    %c0_2 = arith.constant 0 : index
    %c0_3 = arith.constant 0 : index
    %8 = vector.load %arg2[%c0_2, %c0_3] : memref<1x2048xf32, #tpu.memory_space<vmem>>, vector<1x2048xf32>
    tpu.vector_store %arg2[%c0_2, %c0_3], %7 {strides = array<i32>} : memref<1x2048xf32, #tpu.memory_space<vmem>>, vector<1x2048xf32>,
    return
  }
  func.func @transform_0(%arg0: i32) -> (i32, i32) {
    %c0_i32 = arith.constant 0 : i32
    %c0_i32_0 = arith.constant 0 : i32
    return %arg0, %c0_i32 : i32, i32
  }
  func.func @transform_1(%arg0: i32) -> (i32, i32) {
    %c0_i32 = arith.constant 0 : i32
    %c0_i32_0 = arith.constant 0 : i32
    return %arg0, %c0_i32 : i32, i32
  }
}

</mosaic_0001>

<llo_original>
// kernel: tpu_custom_call.1
$region0: #{tpu_custom_call.1}
  #allocation0 [shape = 'u32[]', space=smem, size = 0x4, offset = 0x4, fixed_abs, tag = 'smem constant byte address 0x4 - core index']
  #allocation1 [shape = 'u32[144,128]{1,0:T(1,128)}', space=vmem, size = 0x12000, scoped, tag = 'internal scratch']
  %s0 = inlined_call_operand.hbm [shape: f32[1,2048], index: 0, kind: input, shape index: {}]
  %s1 = inlined_call_operand.hbm [shape: f32[1,2048], index: 1, kind: output, shape index: {}]
  %s2 = sld [smem:[#allocation0]]
  $region18: #{tpu_custom_call.1} parent=0
    _
  %s4 = ssub.s32 1, %s2
  %s5 = scalar_select 0, %s4, %s2
  $region1: #{tpu_custom_call.1} parent=0
    #allocation2 [shape = 'u8[8192]{0}', space=vmem, size = 0x2000, scoped, tag = 'input window, operand 0, single buffered']
    #allocation3 [shape = 's32[1]{0}', space=sflag, size = 0x4, scoped, tag = 'scoped memory for tpu_custom_call.1']
    #allocation4 [shape = 's32[1]{0}', space=sflag, size = 0x4, scoped, tag = 'scoped memory for tpu_custom_call.1']
    #allocation5 [shape = 'u8[8192]{0}', space=vmem, size = 0x2000, scoped, tag = 'output window, operand 0, single buffered']
    %6 = vsyncpa [#allocation3], 0
    %7 = vsyncpa [#allocation4], 0
    // Predicated region
    $region2: #{tpu_custom_call.1} parent=1 // pred_check
      _
    $region3: #{tpu_custom_call.1} parent=1 // pred_check_branch
      %9 = sbr.rel (0) target = $region5
    $region4: #{tpu_custom_call.1} parent=1 // pred_region
      %s11 = ssub.s32 256, 256
      %12 = vsyncadd [#allocation3], %s11
      %s14 = sshll.u32 [#allocation2], 4
      %s15 = int_to_ptr.vmem [resolvable:$true] %s14
      %17 = dma.hbm_to_vmem [thread:$0]  %s0, 256, %s15, [#allocation3]
    $region5: #{tpu_custom_call.1} parent=1 // pred_fallthru
      _
    // Predicated region
    $region6: #{tpu_custom_call.1} parent=1 // pred_check
      _
    $region7: #{tpu_custom_call.1} parent=1 // pred_check_branch
      %19 = sbr.rel (0) target = $region9
    $region8: #{tpu_custom_call.1} parent=1 // pred_region
      %20 = dma.done [#allocation3], 256
    $region9: #{tpu_custom_call.1} parent=1 // pred_fallthru
      _
    %v21 = vld [vmem:[#allocation2] sm:$0xff]
    %v22 = vld [vmem:[#allocation2 + $0x8] sm:$0xff]
    %v23 = vxor.u32 %v21, 2147483648
    %v24 = vxor.u32 %v22, 2147483648
    %v25 = vmul.f32 %v23, 1.442695
    %v26 = vpow.pop %v25
    %v27 = vmul.f32 %v24, 1.442695
    %v28 = vpow.pop %v27
    %v29 = vadd.f32 %v26, 1.0
    %v30 = vadd.f32 %v28, 1.0
    %v31 = vrcp.pop %v29
    %v32 = vmul.f32 1.0, %v31
    %v33 = vrcp.pop %v30
    %v34 = vmul.f32 1.0, %v33
    %v35 = vmul.f32 %v32, 2.0
    %v36 = vmul.f32 %v34, 2.0
    %37 = vst [vmem:[#allocation5] sm:$0xff] %v35
    %38 = vst [vmem:[#allocation5 + $0x8] sm:$0xff] %v36
    // Predicated region
    $region10: #{tpu_custom_call.1} parent=1 // pred_check
      _
    $region11: #{tpu_custom_call.1} parent=1 // pred_check_branch
      %40 = sbr.rel (0) target = $region13
    $region12: #{tpu_custom_call.1} parent=1 // pred_region
      %s42 = ssub.s32 256, 256
      %43 = vsyncadd [#allocation4], %s42
      %s45 = sshll.u32 [#allocation5], 4
      %s46 = int_to_ptr.vmem [resolvable:$true] %s45
      %48 = dma.vmem_to_hbm [thread:$0]  %s46, 256, %s1, [#allocation4]
    $region13: #{tpu_custom_call.1} parent=1 // pred_fallthru
      _
    // Predicated region
    $region14: #{tpu_custom_call.1} parent=1 // pred_check
      _
    $region15: #{tpu_custom_call.1} parent=1 // pred_check_branch
      %50 = sbr.rel (0) target = $region17
    $region16: #{tpu_custom_call.1} parent=1 // pred_region
      %51 = dma.done [#allocation4], 256
    $region17: #{tpu_custom_call.1} parent=1 // pred_fallthru
      _
    %52 = vsyncpa [#allocation3], 1
    %53 = vsyncpa [#allocation4], 1

</llo_original>
